<compile_context>
chip_gen: v6e
topology: v6e:2x2x1
jax: 0.10.0
libtpu: 0.0.40
codegen_flags: <defaults>
</compile_context>

<pallas_src>
import jax
import jax.numpy as jnp
from jax.experimental import pallas as pl
from jax.experimental.pallas import tpu as pltpu


_LANE = 128
_SMALL_BYTES = 32 << 10   # below this, kernel-launch overhead dominates a broadcast add


def _add_pe_kernel(pe_ref, x_ref, o_ref):
    # pe_ref: (1, s_blk, 128), x_ref/o_ref: (B, s_blk, 128).  Pure VPU broadcast add.
    o_ref[...] = x_ref[...] + pe_ref[...]


def _round_up(v, m):
    return -(-v // m) * m


def _choose_s_block(S, B, itemsize, budget_bytes=12 << 20):
    """Sublane-tile height (multiple of 8) for the (B, s_blk, 128) x/out blocks.

    Budget counts the real double-buffered VMEM footprint (2 bufs each for x, out, pe,
    all (8,128)-dense thanks to sublane packing) and stays under v5e's 16 MiB default
    scoped-VMEM limit.  For S >= 16 the tile is also capped at ~S/2 so the grid has at
    least 2 steps and the "parallel" axis can be sharded across both v7x TensorCores.
    """
    if S <= 8:
        return S                                   # full middle dim -> always layout-legal
    s = (budget_bytes // (2 * (2 * B + 1) * _LANE * itemsize)) // 8 * 8
    s = max(8, s)
    if S >= 16:
        s = min(s, _round_up(pl.cdiv(S, 2), 8))    # >= 2 grid steps (v7x megacore)
    return min(s, (S // 8) * 8)


def learned_positional_encoding(x, pe_weight):
    """x: (B, D, L); pe_weight: (P, D) with P >= L.  Returns pe_weight[:L].T[None] + x."""
    B, D, L = x.shape
    P, D_w = pe_weight.shape
    assert D_w == D and P >= L

    # Glue ops (run ONCE outside the grid): slice + transpose + cast.
    # TODO(synk): for repeated calls, cache the table pre-transposed as (D, P) so this
    #             transpose pass (extra HBM read+write of D*L elems) is not re-run per
    #             forward; non-default position_ids would need a scalar-prefetch row gather.
    pe_slice_t = jnp.transpose(pe_weight[:L, :], (1, 0)).astype(x.dtype)   # (D, L)

    N = D * L
    itemsize = jnp.dtype(x.dtype).itemsize
    if N % _LANE != 0 or B * N * itemsize < _SMALL_BYTES:
        # Irregular lane count or tiny input: plain broadcast add beats launch overhead.
        return x + pe_slice_t[None, :, :]

    # Sublane-packed, lane-dense layout: (B, S, 128) with S = N / 128.
    S = N // _LANE
    x_packed = x.reshape(B, S, _LANE)              # contiguous -> free reshape
    pe_packed = pe_slice_t.reshape(1, S, _LANE)

    s_blk = _choose_s_block(S, B, itemsize)
    grid = (pl.cdiv(S, s_blk),)                    # ragged last tile masked by Pallas

    out_packed = pl.pallas_call(
        _add_pe_kernel,
        out_shape=jax.ShapeDtypeStruct((B, S, _LANE), x.dtype),
        grid_spec=pltpu.PrefetchScalarGridSpec(
            num_scalar_prefetch=0,
            grid=grid,
            in_specs=[
                pl.BlockSpec((1, s_blk, _LANE), lambda j: (0, j, 0)),   # small PE chunk
                pl.BlockSpec((B, s_blk, _LANE), lambda j: (0, j, 0)),   # x chunk
            ],
            out_specs=pl.BlockSpec((B, s_blk, _LANE), lambda j: (0, j, 0)),
        ),
        input_output_aliases={1: 0},               # in-place add into x's buffer
        compiler_params=pltpu.CompilerParams(
            dimension_semantics=("parallel",),     # independent tiles -> megacore / v7x
        ),
    )(pe_packed, x_packed)

    return out_packed.reshape(B, D, L)


if __name__ == "__main__":
    key = jax.random.PRNGKey(0)
    k_w, k_x = jax.random.split(key)

    # Kernel path: B=2, D=64, L=128  ->  N = 8192 = 64 sublane rows x 128 lanes.
    max_position_embeddings = 256
    embedding_dim = 64      # D
    batch = 2               # B
    seq_len = 128           # L

    # nn.Embedding default init: N(0, 1)
    pe_weight = jax.random.normal(
        k_w, (max_position_embeddings, embedding_dim), dtype=jnp.float32)
    x = jax.random.normal(k_x, (batch, embedding_dim, seq_len), dtype=jnp.float32)

    # Reference computed BEFORE the kernel call (the kernel may alias/donate x's packed buffer).
    ref = jnp.transpose(pe_weight[:seq_len, :], (1, 0))[None, :, :] + x
    out = jax.block_until_ready(learned_positional_encoding(x, pe_weight))
    assert out.shape == (batch, embedding_dim, seq_len)
    assert jnp.allclose(out, ref, atol=1e-6, rtol=1e-6)

    # Fallback path (N not a multiple of 128 / tiny input) correctness check.
    x_small = jax.random.normal(jax.random.PRNGKey(1), (2, 24, 10), dtype=jnp.float32)
    pe_small = jax.random.normal(jax.random.PRNGKey(2), (16, 24), dtype=jnp.float32)
    ref_small = jnp.transpose(pe_small[:10, :], (1, 0))[None, :, :] + x_small
    out_small = jax.block_until_ready(learned_positional_encoding(x_small, pe_small))
    assert jnp.allclose(out_small, ref_small, atol=1e-6, rtol=1e-6)

    print("KERNEL_OK")
</pallas_src>

<mosaic_0001>
module attributes {stable_mosaic.version = 11 : i64} {
  func.func @_add_pe_kernel(%arg0: i32, %arg1: memref<1x32x128xf32, #tpu.memory_space<vmem>>, %arg2: memref<2x32x128xf32, #tpu.memory_space<vmem>>, %arg3: memref<2x32x128xf32, #tpu.memory_space<vmem>>) attributes {dimension_semantics = [#tpu.dimension_semantics<parallel>], iteration_bounds = array<i64: 2>, scalar_prefetch = 0 : i64, scratch_operands = 0 : i64, tpu.core_type = #tpu.core_type<tc>, window_params = [{transform_indices = @transform_0, window_bounds = array<i64: 1, 32, 128>}, {transform_indices = @transform_1, window_bounds = array<i64: 2, 32, 128>}, {transform_indices = @transform_2, window_bounds = array<i64: 2, 32, 128>}]} {
    %c0 = arith.constant 0 : index
    %c0_0 = arith.constant 0 : index
    %c0_1 = arith.constant 0 : index
    %0 = vector.load %arg2[%c0, %c0_0, %c0_1] : memref<2x32x128xf32, #tpu.memory_space<vmem>>, vector<2x32x128xf32>
    %c0_2 = arith.constant 0 : index
    %c0_3 = arith.constant 0 : index
    %c0_4 = arith.constant 0 : index
    %1 = vector.load %arg1[%c0_2, %c0_3, %c0_4] : memref<1x32x128xf32, #tpu.memory_space<vmem>>, vector<1x32x128xf32>
    %2 = vector.broadcast %1 : vector<1x32x128xf32> to vector<2x32x128xf32>
    %3 = arith.addf %0, %2 : vector<2x32x128xf32>
    %c0_5 = arith.constant 0 : index
    %c0_6 = arith.constant 0 : index
    %c0_7 = arith.constant 0 : index
    %4 = vector.load %arg3[%c0_5, %c0_6, %c0_7] : memref<2x32x128xf32, #tpu.memory_space<vmem>>, vector<2x32x128xf32>
    tpu.vector_store %arg3[%c0_5, %c0_6, %c0_7], %3 {strides = array<i32>} : memref<2x32x128xf32, #tpu.memory_space<vmem>>, vector<2x32x128xf32>,
    return
  }
  func.func @transform_0(%arg0: i32) -> (i32, i32, i32) {
    %c0_i32 = arith.constant 0 : i32
    %c0_i32_0 = arith.constant 0 : i32
    %c0_i32_1 = arith.constant 0 : i32
    return %c0_i32, %arg0, %c0_i32_0 : i32, i32, i32
  }
  func.func @transform_1(%arg0: i32) -> (i32, i32, i32) {
    %c0_i32 = arith.constant 0 : i32
    %c0_i32_0 = arith.constant 0 : i32
    %c0_i32_1 = arith.constant 0 : i32
    return %c0_i32, %arg0, %c0_i32_0 : i32, i32, i32
  }
  func.func @transform_2(%arg0: i32) -> (i32, i32, i32) {
    %c0_i32 = arith.constant 0 : i32
    %c0_i32_0 = arith.constant 0 : i32
    %c0_i32_1 = arith.constant 0 : i32
    return %c0_i32, %arg0, %c0_i32_0 : i32, i32, i32
  }
}

</mosaic_0001>

<llo_original>
// kernel: tpu_custom_call.1
$region0: #{tpu_custom_call.1}
  #allocation0 [shape = 'u32[]', space=smem, size = 0x4, offset = 0x4, fixed_abs, tag = 'smem constant byte address 0x4 - core index']
  #allocation1 [shape = 'u32[144,128]{1,0:T(1,128)}', space=vmem, size = 0x12000, scoped, tag = 'internal scratch']
  #allocation6 [shape = 's32[]', space=sflag, size = 0x4, offset = 0, fixed_abs, tag = 'sflag constant byte address 0x0 - dummy sync flag']
  #allocation8 [shape = 's32[]', space=sflag, size = 0x4, offset = 0, fixed_abs, tag = 'sflag constant byte address 0x0 - dummy sync flag']
  %s0 = inlined_call_operand.vmem [shape: f32[1,64,128], index: 0, kind: input, shape index: {}]
  %s1 = inlined_call_operand.hbm [shape: f32[2,64,128], index: 1, kind: input, shape index: {}, may-alias: {1,2}]
  %s2 = inlined_call_operand.hbm [shape: f32[2,64,128], index: 2, kind: output, shape index: {}, may-alias: {1,2}]
  %s3 = sld [smem:[#allocation0]]
  $region45: #{tpu_custom_call.1} parent=0
    _
  %s5 = ssub.s32 1, %s3
  %s6 = scalar_select 0, %s5, %s3
  $region1: #{tpu_custom_call.1} parent=0
    #allocation2 [shape = 'u8[65536]{0}', space=vmem, size = 0x10000, scoped, tag = 'input window, operand 1']
    #allocation3 [shape = 's32[2]{0}', space=sflag, size = 0x8, scoped, tag = 'scoped memory for tpu_custom_call.1']
    #allocation4 [shape = 's32[2]{0}', space=sflag, size = 0x8, scoped, tag = 'scoped memory for tpu_custom_call.1']
    #allocation5 [shape = 'u8[65536]{0}', space=vmem, size = 0x10000, scoped, tag = 'output window, operand 0']
    %7 = vsyncpa [#allocation3], 0
    %s8 = scalar_lea.sflag [#allocation3], 1
    %9 = vsyncpa %s8, 0
    %10 = vsyncpa [#allocation4], 0
    %s11 = scalar_lea.sflag [#allocation4], 1
    %12 = vsyncpa %s11, 0
    loop: start=0, step=1, limit=4
    $region2: #{tpu_custom_call.1} parent=1 // loop_pre_header
      _
    $region3: #{tpu_custom_call.1} parent=1 // loop_header
      %s14 = sphi 0, %s18
      %p15 = scmp.ge.s32.totalorder %s14, 4
      %s24 = sphi 0, %s26
      %s27 = sphi 0, %s24
      %s28 = sphi 0, %s27
      %s44 = sphi 0, %s28
      %s50 = sphi 0, %s52
      %s53 = sphi 0, %s50
      %s54 = sphi 0, %s53
      %s70 = sphi 0, %s54
      %s76 = sphi 0, %s78
      %s79 = sphi 0, %s76
      %s80 = sphi 0, %s79
      %s96 = sphi 0, %s80
    $region4: #{tpu_custom_call.1} parent=1 // loop_header_branch
      %17 = sbr.rel (%p15) target = $region8
    $region5: #{tpu_custom_call.1} parent=1 // loop_body
      %s19 = ssub.s32 %s14, 1
      %s20 = ssub.s32 %s14, 2
      %s21 = sadd.s32 %s14, 1
      %s22 = ssub.s32 %s14, %s21
      %p23 = scmp.eq.s32.totalorder %s22, 0
      %s25 = sadd.s32 %s24, 1
      %s26 = scalar_select %p23, %s24, %s25
      %p29 = pneg %p23
      %p30 = scmp.eq.s32.totalorder %s14, 1
      %p31 = por %p29, %p30
      %p32 = scmp.ne.s32.totalorder %s24, %s27
      %p33 = scmp.eq.s32.totalorder %s14, 0
      %p34 = por %p32, %p33
      %p35 = scmp.ne.s32.totalorder %s24, %s27
      %p36 = scmp.eq.s32.totalorder %s19, 1
      %p37 = por %p35, %p36
      %p38 = scmp.ne.s32.totalorder %s27, %s28
      %p39 = scmp.eq.s32.totalorder %s19, 0
      %p40 = por %p38, %p39
      %p41 = scmp.ne.s32.totalorder %s27, %s28
      %p42 = scmp.eq.s32.totalorder %s20, 1
      %p43 = por %p41, %p42
      %p45 = scmp.ne.s32.totalorder %s28, %s44
      %p46 = scmp.eq.s32.totalorder %s20, 0
      %p47 = por %p45, %p46
      %s48 = ssub.s32 %s14, %s21
      %p49 = scmp.eq.s32.totalorder %s48, 0
      %s51 = sadd.s32 %s50, 1
      %s52 = scalar_select %p49, %s50, %s51
      %p55 = pneg %p49
      %p56 = scmp.eq.s32.totalorder %s14, 1
      %p57 = por %p55, %p56
      %p58 = scmp.ne.s32.totalorder %s50, %s53
      %p59 = scmp.eq.s32.totalorder %s14, 0
      %p60 = por %p58, %p59
      %p61 = scmp.ne.s32.totalorder %s50, %s53
      %p62 = scmp.eq.s32.totalorder %s19, 1
      %p63 = por %p61, %p62
      %p64 = scmp.ne.s32.totalorder %s53, %s54
      %p65 = scmp.eq.s32.totalorder %s19, 0
      %p66 = por %p64, %p65
      %p67 = scmp.ne.s32.totalorder %s53, %s54
      %p68 = scmp.eq.s32.totalorder %s20, 1
      %p69 = por %p67, %p68
      %p71 = scmp.ne.s32.totalorder %s54, %s70
      %p72 = scmp.eq.s32.totalorder %s20, 0
      %p73 = por %p71, %p72
      %s74 = ssub.s32 %s14, %s21
      %p75 = scmp.eq.s32.totalorder %s74, 0
      %s77 = sadd.s32 %s76, 1
      %s78 = scalar_select %p75, %s76, %s77
      %p81 = pneg %p75
      %p82 = scmp.eq.s32.totalorder %s14, 1
      %p83 = por %p81, %p82
      %p84 = scmp.ne.s32.totalorder %s76, %s79
      %p85 = scmp.eq.s32.totalorder %s14, 0
      %p86 = por %p84, %p85
      %p87 = scmp.ne.s32.totalorder %s76, %s79
      %p88 = scmp.eq.s32.totalorder %s19, 1
      %p89 = por %p87, %p88
      %p90 = scmp.ne.s32.totalorder %s79, %s80
      %p91 = scmp.eq.s32.totalorder %s19, 0
      %p92 = por %p90, %p91
      %p93 = scmp.ne.s32.totalorder %s79, %s80
      %p94 = scmp.eq.s32.totalorder %s20, 1
      %p95 = por %p93, %p94
      %p97 = scmp.ne.s32.totalorder %s80, %s96
      %p98 = scmp.eq.s32.totalorder %s20, 0
      %p99 = por %p97, %p98
      %p100 = scmp.le.s32.totalorder 1, %s14
      %p101 = scmp.lt.s32.totalorder %s14, 3
      %p102 = pnand %p100, %p101
      %p103 = pneg %p102
      // Predicated region
      $region9: #{tpu_custom_call.1} parent=5 // pred_check
        _
      $region10: #{tpu_custom_call.1} parent=5 // pred_check_branch
        %105 = sbr.rel (%p102) target = $region12
      $region11: #{tpu_custom_call.1} parent=5 // pred_region
        %s106 = ssub.s32 %s14, 1
      $region12: #{tpu_custom_call.1} parent=5 // pred_fallthru
        _
      %p107 = scmp.lt.s32.totalorder %s14, 2
      // Predicated region
      $region13: #{tpu_custom_call.1} parent=5 // pred_check
        %p108 = pneg %p107
      $region14: #{tpu_custom_call.1} parent=5 // pred_check_branch
        %110 = sbr.rel (%p108) target = $region16
      $region15: #{tpu_custom_call.1} parent=5 // pred_region
        // Predicated region
        $region17: #{tpu_custom_call.1} parent=15 // pred_check
          %p111 = pneg %p34
        $region18: #{tpu_custom_call.1} parent=15 // pred_check_branch
          %113 = sbr.rel (%p111) target = $region20
        $region19: #{tpu_custom_call.1} parent=15 // pred_region
          %s114 = smul.u32 4, %s14
          %p115 = scmp.lt.s32.totalorder %s114, 7
          %s116 = scalar_select %p115, %s114, 7
          %s117 = smul.addr %s116, 8
          %s118 = scalar_lea.vmem %s0, %s117
          %s119 = smul.u32 4, %s14
        $region20: #{tpu_custom_call.1} parent=15 // pred_fallthru
          _
        // Predicated region
        $region21: #{tpu_custom_call.1} parent=15 // pred_check
          %p120 = pneg %p60
        $region22: #{tpu_custom_call.1} parent=15 // pred_check_branch
          %122 = sbr.rel (%p120) target = $region24
        $region23: #{tpu_custom_call.1} parent=15 // pred_region
          #allocation7 [shape = 'u32[6]{0}', space=smem, size = 0x18, scoped, tag = 'DMA stride descriptor']
          %s123 = sand.u32 %s50, 1
          %s124 = scalar_lea.sflag [#allocation3], %s123
          %s125 = sand.u32 %s50, 1
          %s126 = smul.addr %s125, 64
          %s127 = scalar_lea.vmem [#allocation2], %s126
          %s128 = smul.u32 4, %s14
          %s130 = ssub.s32 1024, 1024
          %131 = vsyncadd %s124, %s130
          %s132 = smul.addr %s128, 128
          %s133 = scalar_lea.hbm %s1, %s132
          %s135 = sshll.u32 1, 14
          %s136 = sxor.u32 4294967295, %s135
          %s138 = sld [smem:[#allocation0]]
          %s139 = sadd.s32 2, %s138
          %s141 = sshll.u32 7, 26
          %s142 = sxor.u32 4294967295, %s141
          %s143 = sand.u32 0, %s142
          %s144 = sshll.u32 %s139, 26
          %s145 = sor.u32 %s143, %s144
          %s146 = sshll.u32 %s127, 4
          %s147 = int_to_ptr.vmem [resolvable:$true] %s146
          %153 = sst [smem:[#allocation7]] 1024
          %s154 = scalar_lea.smem [#allocation7], 1
          %155 = sst [smem:[%s154]] 512
          %s156 = scalar_lea.smem [#allocation7], 2
          %157 = sst [smem:[%s156]] 4
          %s158 = scalar_lea.smem [#allocation7], 3
          %159 = sst [smem:[%s158]] 128
          %s160 = scalar_lea.smem [#allocation7], 4
          %161 = sst [smem:[%s160]] 128
          %s162 = scalar_lea.smem [#allocation7], 5
          %163 = sst [smem:[%s162]] 8
          %165 = dma.general %s133, 1024, %s147, %s124, 131072, [#allocation7], %s145, 0
        $region24: #{tpu_custom_call.1} parent=15 // pred_fallthru
          _
      $region16: #{tpu_custom_call.1} parent=5 // pred_fallthru
        _
      %p166 = scmp.le.s32.totalorder 1, %s14
      %p167 = scmp.lt.s32.totalorder %s14, 3
      %p168 = pnand %p166, %p167
      %p169 = pneg %p168
      // Predicated region
      $region25: #{tpu_custom_call.1} parent=5 // pred_check
        _
      $region26: #{tpu_custom_call.1} parent=5 // pred_check_branch
        %171 = sbr.rel (%p168) target = $region28
      $region27: #{tpu_custom_call.1} parent=5 // pred_region
        %s172 = ssub.s32 %s14, 1
        %s173 = sand.u32 %s53, 1
        %s174 = scalar_lea.sflag [#allocation3], %s173
        %s175 = sand.u32 %s53, 1
        %s176 = smul.addr %s175, 64
        %s177 = scalar_lea.vmem [#allocation2], %s176
        // Predicated region
        $region29: #{tpu_custom_call.1} parent=27 // pred_check
          %p178 = pneg %p66
        $region30: #{tpu_custom_call.1} parent=27 // pred_check_branch
          %180 = sbr.rel (%p178) target = $region32
        $region31: #{tpu_custom_call.1} parent=27 // pred_region
          %181 = dma.done %s174, 1024
        $region32: #{tpu_custom_call.1} parent=27 // pred_fallthru
          _
        %s182 = smul.u32 4, %s19
        %p183 = scmp.lt.s32.totalorder %s182, 7
        %s184 = scalar_select %p183, %s182, 7
        %s185 = smul.addr %s184, 8
        %s186 = scalar_lea.vmem %s0, %s185
        %p187 = pneg %p40
        %p188 = pneg %p37
        %s189 = sand.u32 %s53, 1
        %s190 = scalar_lea.sflag [#allocation3], %s189
        %s191 = sand.u32 %s53, 1
        %s192 = smul.addr %s191, 64
        %s193 = scalar_lea.vmem [#allocation2], %s192
        %p194 = pneg %p66
        %p195 = pneg %p63
        %p196 = pneg %p92
        %p197 = pneg %p89
        %s198 = sand.u32 %s79, 1
        %s199 = scalar_lea.sflag [#allocation4], %s198
        %s200 = sand.u32 %s79, 1
        %s201 = smul.addr %s200, 64
        %s202 = scalar_lea.vmem [#allocation5], %s201
        %s203 = smul.u32 4, %s19
        %p204 = scmp.lt.s32.totalorder %s203, 7
        %s205 = scalar_select %p204, %s203, 7
        %s206 = smul.addr %s205, 8
        %s207 = scalar_lea.vmem %s0, %s206
        %s208 = smul.u32 4, %s19
        %s209 = smul.u32 4, %s19
        %s210 = smul.u32 4, %s19
        %v211 = vld [vmem:[%s177] sm:$0xff]
        %v212 = vld [vmem:[%s177 + $0x8] sm:$0xff]
        %v213 = vld [vmem:[%s177 + $0x10] sm:$0xff]
        %v214 = vld [vmem:[%s177 + $0x18] sm:$0xff]
        %v215 = vld [vmem:[%s177 + $0x20] sm:$0xff]
        %v216 = vld [vmem:[%s177 + $0x28] sm:$0xff]
        %v217 = vld [vmem:[%s177 + $0x30] sm:$0xff]
        %v218 = vld [vmem:[%s177 + $0x38] sm:$0xff]
        %v219 = vld [vmem:[%s207] sm:$0xff]
        %v220 = vld [vmem:[%s207 + $0x8] sm:$0xff]
        %v221 = vld [vmem:[%s207 + $0x10] sm:$0xff]
        %v222 = vld [vmem:[%s207 + $0x18] sm:$0xff]
        %v223 = vadd.f32 %v211, %v219
        %v224 = vadd.f32 %v212, %v220
        %v225 = vadd.f32 %v213, %v221
        %v226 = vadd.f32 %v214, %v222
        %v227 = vadd.f32 %v215, %v219
        %v228 = vadd.f32 %v216, %v220
        %v229 = vadd.f32 %v217, %v221
        %v230 = vadd.f32 %v218, %v222
        %231 = vst [vmem:[%s202] sm:$0xff] %v223
        %232 = vst [vmem:[%s202 + $0x8] sm:$0xff] %v224
        %233 = vst [vmem:[%s202 + $0x10] sm:$0xff] %v225
        %234 = vst [vmem:[%s202 + $0x18] sm:$0xff] %v226
        %235 = vst [vmem:[%s202 + $0x20] sm:$0xff] %v227
        %236 = vst [vmem:[%s202 + $0x28] sm:$0xff] %v228
        %237 = vst [vmem:[%s202 + $0x30] sm:$0xff] %v229
        %238 = vst [vmem:[%s202 + $0x38] sm:$0xff] %v230
        %s239 = sand.u32 %s79, 1
        %s240 = scalar_lea.sflag [#allocation4], %s239
        %s241 = sand.u32 %s79, 1
        %s242 = smul.addr %s241, 64
        %s243 = scalar_lea.vmem [#allocation5], %s242
        // Predicated region
        $region33: #{tpu_custom_call.1} parent=27 // pred_check
          %p244 = pneg %p89
        $region34: #{tpu_custom_call.1} parent=27 // pred_check_branch
          %246 = sbr.rel (%p244) target = $region36
        $region35: #{tpu_custom_call.1} parent=27 // pred_region
          #allocation9 [shape = 'u32[6]{0}', space=smem, size = 0x18, scoped, tag = 'DMA stride descriptor']
          %s247 = smul.u32 4, %s19
          %s249 = ssub.s32 1024, 1024
          %250 = vsyncadd %s240, %s249
          %s251 = smul.addr %s247, 128
          %s252 = scalar_lea.hbm %s2, %s251
          %s254 = sshll.u32 1, 14
          %s255 = sxor.u32 4294967295, %s254
          %s258 = sshll.u32 7, 18
          %s259 = sxor.u32 4294967295, %s258
          %s260 = sand.u32 0, %s259
          %s262 = sor.u32 %s260, 0
          %s263 = sshll.u32 %s243, 4
          %s264 = int_to_ptr.vmem [resolvable:$true] %s263
          %270 = sst [smem:[#allocation9]] 512
          %s271 = scalar_lea.smem [#allocation9], 1
          %272 = sst [smem:[%s271]] 1024
          %s273 = scalar_lea.smem [#allocation9], 2
          %274 = sst [smem:[%s273]] 4
          %s275 = scalar_lea.smem [#allocation9], 3
          %276 = sst [smem:[%s275]] 128
          %s277 = scalar_lea.smem [#allocation9], 4
          %278 = sst [smem:[%s277]] 128
          %s279 = scalar_lea.smem [#allocation9], 5
          %280 = sst [smem:[%s279]] 8
          %282 = dma.general %s264, 1024, %s252, %s240, 131072, [#allocation9], %s262, 0
        $region36: #{tpu_custom_call.1} parent=27 // pred_fallthru
          _
      $region28: #{tpu_custom_call.1} parent=5 // pred_fallthru
        _
      %p283 = scmp.le.s32.totalorder 2, %s14
      // Predicated region
      $region37: #{tpu_custom_call.1} parent=5 // pred_check
        %p284 = pneg %p283
      $region38: #{tpu_custom_call.1} parent=5 // pred_check_branch
        %286 = sbr.rel (%p284) target = $region40
      $region39: #{tpu_custom_call.1} parent=5 // pred_region
        %s287 = ssub.s32 %s14, 2
        // Predicated region
        $region41: #{tpu_custom_call.1} parent=39 // pred_check
          %p288 = pneg %p95
        $region42: #{tpu_custom_call.1} parent=39 // pred_check_branch
          %290 = sbr.rel (%p288) target = $region44
        $region43: #{tpu_custom_call.1} parent=39 // pred_region
          %s291 = sand.u32 %s80, 1
          %s292 = scalar_lea.sflag [#allocation4], %s291
          %s293 = sand.u32 %s80, 1
          %s294 = smul.addr %s293, 64
          %s295 = scalar_lea.vmem [#allocation5], %s294
          %296 = dma.done %s292, 1024
        $region44: #{tpu_custom_call.1} parent=39 // pred_fallthru
          _
      $region40: #{tpu_custom_call.1} parent=5 // pred_fallthru
        _
    $region6: #{tpu_custom_call.1} parent=1 // loop_footer
      %s18 = sadd.s32 1, %s14
    $region7: #{tpu_custom_call.1} parent=1 // loop_footer_branch
      %13 = sbr.rel target = $region3
    $region8: #{tpu_custom_call.1} parent=1 // loop_exit
      _
    %297 = vsyncpa [#allocation3], 1
    %s298 = scalar_lea.sflag [#allocation3], 1
    %299 = vsyncpa %s298, 1
    %300 = vsyncpa [#allocation4], 1
    %s301 = scalar_lea.sflag [#allocation4], 1
    %302 = vsyncpa %s301, 1

</llo_original>
